<compile_context>
chip_gen: v7x
topology: tpu7x:2x2x1
jax: 0.10.0
libtpu: 0.0.40
codegen_flags: <defaults>
</compile_context>

<pallas_src>
import functools
import math

import jax
import jax.numpy as jnp
from jax.experimental import pallas as pl
from jax.experimental.pallas import tpu as pltpu


def _hsblock_kernel(x_ref, w_ref, b_ref, o_ref, *, H, W, chunk, s, w_out, c_max):
    """Fused HSBlock forward for one batch element (channels-major layout).

    x_ref : (C_in, H*W)            flattened NCHW input slab
    w_ref : (s-1, 3, w_out, c_max) per-branch, per-tap BN-folded, zero-padded weights
    b_ref : (s-1, w_out, 1)        per-branch folded bias
    o_ref : (C_total, H*W)         output slab: [chunk0, y1_1, ..., y1_{s-2}, y_{s-1}]
    """
    HW = H * W
    half = w_out // 2

    # Chunk 0 passes straight through to the output (x[0] in the PyTorch code).
    # Full-lane (HW-wide) store.
    o_ref[0:chunk, :] = x_ref[0:chunk, :].astype(o_ref.dtype)

    # Lane-position iota for the conv's H halo mask (rows h == 0 / h == H-1).
    pos = jax.lax.broadcasted_iota(jnp.int32, (c_max, HW), 1)

    carry = None          # y2 of the previous branch, (w_out//2, HW), f32
    out_off = chunk
    for i in range(1, s):                                   # static unroll over branches
        xin = x_ref[i * chunk:(i + 1) * chunk, :].astype(jnp.float32)   # (chunk, HW)
        if carry is None:
            # Branch 1 has no carry; its padded weight columns are zero, but feed real
            # zeros (never stale memory) so 0*NaN can't happen.
            x_full = jnp.concatenate(
                [xin, jnp.zeros((c_max - chunk, HW), jnp.float32)], axis=0)
        else:
            # Branches >= 2 see cat(original chunk, y2 of previous branch) on channels.
            x_full = jnp.concatenate([xin, carry], axis=0)              # (c_max, HW)

        # Conv taps via XLU lane rolls along the flattened H*W axis; a shift of one H
        # row is W flat positions.  Halo (padding=(1,0)) -> zero the wrapped-around
        # first/last W columns.
        x_up = jnp.where(pos >= W,
                         pltpu.roll(x_full, shift=W, axis=1), 0.0)        # x[h-1]
        x_dn = jnp.where(pos < HW - W,
                         pltpu.roll(x_full, shift=HW - W, axis=1), 0.0)   # x[h+1]

        # Three small MXU dots (w_out x c_max) . (c_max x HW); BN scale pre-folded.
        acc = (jnp.dot(w_ref[i - 1, 0], x_up, preferred_element_type=jnp.float32)
               + jnp.dot(w_ref[i - 1, 1], x_full, preferred_element_type=jnp.float32)
               + jnp.dot(w_ref[i - 1, 2], x_dn, preferred_element_type=jnp.float32))
        y = jnp.maximum(acc + b_ref[i - 1], 0.0)             # (w_out, HW), folded bias+ReLU

        if i == s - 1:                                       # last branch: all channels out
            o_ref[out_off:out_off + w_out, :] = y.astype(o_ref.dtype)
        else:                                                # y1 -> output, y2 -> carry
            o_ref[out_off:out_off + half, :] = y[0:half, :].astype(o_ref.dtype)
            carry = y[half:w_out, :]
            out_off += half


@functools.partial(jax.jit, static_argnames=("s", "w_width"))
def hs_block_forward(x_nchw, w_stack, b_stack, *, s, w_width):
    """Replicates HSBlock.forward; input/output are NCHW like PyTorch."""
    N, C_in, H, W = x_nchw.shape
    chunk = C_in // s
    c_max = chunk + w_width // 2
    c_out_total = chunk + (s - 2) * (w_width // 2) + w_width
    HW = H * W

    # Flattened NCHW is already channels-major: pure reshape, no transpose/copy.
    x_flat = x_nchw.reshape(N, C_in, HW)

    kernel = functools.partial(_hsblock_kernel, H=H, W=W, chunk=chunk, s=s,
                               w_out=w_width, c_max=c_max)
    out_flat = pl.pallas_call(
        kernel,
        out_shape=jax.ShapeDtypeStruct((N, c_out_total, HW), x_nchw.dtype),
        grid=(N,),
        in_specs=[
            pl.BlockSpec((None, C_in, HW), lambda n: (n, 0, 0)),
            pl.BlockSpec((s - 1, 3, w_width, c_max), lambda n: (0, 0, 0, 0)),
            pl.BlockSpec((s - 1, w_width, 1), lambda n: (0, 0, 0)),
        ],
        out_specs=pl.BlockSpec((None, c_out_total, HW), lambda n: (n, 0, 0)),
        compiler_params=pltpu.CompilerParams(dimension_semantics=("parallel",)),
    )(x_flat, w_stack, b_stack)

    return out_flat.reshape(N, c_out_total, H, W)            # pure reshape back to NCHW


def init_hsblock_params(key, in_planes, s, w):
    """Deterministic init matching HSBlock.__init__ / initialize_weights, with the
    eval-mode BatchNorm scale folded into the conv weights.  Weights are stored per
    conv tap as (s-1, 3, w_out, c_max), input-channel zero-padded to a common c_max."""
    assert in_planes % s == 0, "demo assumes in_planes divisible by s"
    in_ch = in_planes // s
    c_max = in_ch + w // 2
    eps = 1e-5
    w_list, b_list = [], []
    for i in range(1, s):
        # in_ch_last == in_ch when in_planes % s == 0, so every branch >= 2 has c_max.
        c_in = in_ch if i == 1 else in_ch + w // 2
        key, sub = jax.random.split(key)
        fan_out = w * 3 * 1                                  # kaiming_normal_, fan_out, relu
        std = math.sqrt(2.0 / fan_out)
        w_torch = std * jax.random.normal(sub, (w, c_in, 3, 1), dtype=jnp.float32)
        conv_bias = jnp.zeros((w,), jnp.float32)             # zeroed conv bias
        gamma = jnp.ones((w,), jnp.float32)                  # BN weight = 1
        beta = jnp.zeros((w,), jnp.float32)                  # BN bias = 0
        run_mean = jnp.zeros((w,), jnp.float32)
        run_var = jnp.ones((w,), jnp.float32)
        eff_scale = gamma / jnp.sqrt(run_var + eps)
        eff_bias = (conv_bias - run_mean) * eff_scale + beta
        # (w_out, c_in, 3, 1) -> (3, w_out, c_in); fold BN scale; pad c_in -> c_max.
        w_k = jnp.transpose(w_torch[..., 0], (2, 0, 1))
        w_fold = w_k * eff_scale[None, :, None]
        w_pad = jnp.pad(w_fold, ((0, 0), (0, 0), (0, c_max - c_in)))
        w_list.append(w_pad)                                 # (3, w_out, c_max)
        b_list.append(eff_bias.reshape(w, 1))
    return jnp.stack(w_list), jnp.stack(b_list)              # (s-1,3,w,c_max), (s-1,w,1)


def _reference_forward(x, w_stack, b_stack, *, s, w_width):
    """Pure-JAX reference (NCHW), same folded parameters, for correctness checking."""
    N, C, H, W = x.shape
    chunk = C // s
    half = w_width // 2
    out = x[:, 0:chunk]
    carry = None
    for i in range(1, s):
        xin = x[:, i * chunk:(i + 1) * chunk]
        if carry is not None:
            xin = jnp.concatenate([xin, carry], axis=1)
        c_in = xin.shape[1]
        xp = jnp.pad(xin, ((0, 0), (0, 0), (1, 1), (0, 0)))  # H halo (padding=(1,0))
        y = jnp.zeros((N, w_width, H, W), jnp.float32)
        for kh in range(3):
            wk = w_stack[i - 1, kh][:, :c_in]                # (w_out, c_in)
            xt = xp[:, :, kh:kh + H, :]                      # (N, c_in, H, W)
            y = y + jnp.einsum("oc,nchw->nohw", wk, xt,
                               precision=jax.lax.Precision.HIGHEST)
        y = jnp.maximum(y + b_stack[i - 1].reshape(1, w_width, 1, 1), 0.0)
        if i == s - 1:
            out = jnp.concatenate([out, y], axis=1)
        else:
            out = jnp.concatenate([out, y[:, :half]], axis=1)
            carry = y[:, half:]
    return out


if __name__ == "__main__":
    key = jax.random.PRNGKey(0)
    N, in_planes, H, W = 2, 8, 16, 16
    s, w_width = 4, 8
    k_x, k_p = jax.random.split(key)
    x = jax.random.normal(k_x, (N, in_planes, H, W), dtype=jnp.float32)
    w_stack, b_stack = init_hsblock_params(k_p, in_planes, s, w_width)

    out = hs_block_forward(x, w_stack, b_stack, s=s, w_width=w_width)
    out = jax.block_until_ready(out)

    expected_c = in_planes // s + (s - 2) * (w_width // 2) + w_width  # = 18
    assert out.shape == (N, expected_c, H, W), out.shape
    assert bool(jnp.all(jnp.isfinite(out)))

    ref = _reference_forward(x, w_stack, b_stack, s=s, w_width=w_width)
    max_err = float(jnp.max(jnp.abs(out - ref)))
    assert max_err < 5e-2, f"numerical mismatch vs reference: max_err={max_err}"

    print("KERNEL_OK")
</pallas_src>

<mosaic_0001>
module attributes {stable_mosaic.version = 11 : i64} {
  func.func @_hsblock_kernel(%arg0: i32, %arg1: memref<1x8x256xf32, #tpu.memory_space<vmem>>, %arg2: memref<3x3x8x6xf32, #tpu.memory_space<vmem>>, %arg3: memref<3x8x1xf32, #tpu.memory_space<vmem>>, %arg4: memref<1x18x256xf32, #tpu.memory_space<vmem>>) attributes {dimension_semantics = [#tpu.dimension_semantics<parallel>], iteration_bounds = array<i64: 2>, scalar_prefetch = 0 : i64, scratch_operands = 0 : i64, tpu.core_type = #tpu.core_type<tc>, window_params = [{transform_indices = @transform_0, window_bounds = array<i64: 1, 8, 256>}, {pipeline_mode = #tpu.pipeline_mode<synchronous>, transform_indices = @transform_1, window_bounds = array<i64: 3, 3, 8, 6>}, {pipeline_mode = #tpu.pipeline_mode<synchronous>, transform_indices = @transform_2, window_bounds = array<i64: 3, 8, 1>}, {transform_indices = @transform_3, window_bounds = array<i64: 1, 18, 256>}]} {
    %c0 = arith.constant 0 : index
    %c0_0 = arith.constant 0 : index
    %c0_1 = arith.constant 0 : index
    %0 = vector.load %arg1[%c0, %c0_0, %c0_1] : memref<1x8x256xf32, #tpu.memory_space<vmem>>, vector<1x2x256xf32>
    %1 = vector.shape_cast %0 : vector<1x2x256xf32> to vector<2x256xf32>
    %c0_2 = arith.constant 0 : index
    %c0_3 = arith.constant 0 : index
    %c0_4 = arith.constant 0 : index
    %2 = vector.load %arg4[%c0_2, %c0_3, %c0_4] : memref<1x18x256xf32, #tpu.memory_space<vmem>>, vector<1x2x256xf32>
    %3 = vector.shape_cast %2 : vector<1x2x256xf32> to vector<2x256xf32>
    %4 = vector.shape_cast %1 : vector<2x256xf32> to vector<1x2x256xf32>
    tpu.vector_store %arg4[%c0_2, %c0_3, %c0_4], %4 {strides = array<i32>} : memref<1x18x256xf32, #tpu.memory_space<vmem>>, vector<1x2x256xf32>,
    %5 = tpu.iota {dimensions = array<i32: 1>} : vector<6x256xi32>
    %c0_5 = arith.constant 0 : index
    %c2 = arith.constant 2 : index
    %c0_6 = arith.constant 0 : index
    %6 = vector.load %arg1[%c0_5, %c2, %c0_6] : memref<1x8x256xf32, #tpu.memory_space<vmem>>, vector<1x2x256xf32>
    %7 = vector.shape_cast %6 : vector<1x2x256xf32> to vector<2x256xf32>
    %cst = arith.constant 0.000000e+00 : f32
    %8 = vector.broadcast %cst : f32 to vector<4x256xf32>
    %9 = tpu.concatenate %7, %8 in 0 : vector<2x256xf32>, vector<4x256xf32> -> vector<6x256xf32>
    %c16_i32 = arith.constant 16 : i32
    %10 = vector.broadcast %c16_i32 : i32 to vector<6x256xi32>
    %11 = arith.cmpi sge, %5, %10 : vector<6x256xi32>
    %c16_i32_7 = arith.constant 16 : i32
    %12 = tpu.dynamic_rotate %9 by %c16_i32_7 dim 1 : vector<6x256xf32>, i32 -> vector<6x256xf32>
    %cst_8 = arith.constant 0.000000e+00 : f32
    %13 = vector.broadcast %cst_8 : f32 to vector<6x256xf32>
    %14 = arith.select %11, %12, %13 : vector<6x256xi1>, vector<6x256xf32>
    %c240_i32 = arith.constant 240 : i32
    %15 = vector.broadcast %c240_i32 : i32 to vector<6x256xi32>
    %16 = arith.cmpi slt, %5, %15 : vector<6x256xi32>
    %c240_i32_9 = arith.constant 240 : i32
    %17 = tpu.dynamic_rotate %9 by %c240_i32_9 dim 1 : vector<6x256xf32>, i32 -> vector<6x256xf32>
    %cst_10 = arith.constant 0.000000e+00 : f32
    %18 = vector.broadcast %cst_10 : f32 to vector<6x256xf32>
    %19 = arith.select %16, %17, %18 : vector<6x256xi1>, vector<6x256xf32>
    %c0_11 = arith.constant 0 : index
    %c0_12 = arith.constant 0 : index
    %c0_13 = arith.constant 0 : index
    %c0_14 = arith.constant 0 : index
    %20 = vector.load %arg2[%c0_11, %c0_12, %c0_13, %c0_14] : memref<3x3x8x6xf32, #tpu.memory_space<vmem>>, vector<1x1x8x6xf32>
    %21 = vector.shape_cast %20 : vector<1x1x8x6xf32> to vector<8x6xf32>
    %cst_15 = arith.constant dense<0.000000e+00> : vector<8x256xf32>
    %22 = tpu.matmul %21, %14, %cst_15 {dimension_numbers = #tpu.dot_dimension_numbers<[1], [0], [0], [1], [0, 0, 1, 1], [], []>} : vector<8x6xf32>, vector<6x256xf32>, vector<8x256xf32> -> vector<8x256xf32>
    %c0_16 = arith.constant 0 : index
    %c1 = arith.constant 1 : index
    %c0_17 = arith.constant 0 : index
    %c0_18 = arith.constant 0 : index
    %23 = vector.load %arg2[%c0_16, %c1, %c0_17, %c0_18] : memref<3x3x8x6xf32, #tpu.memory_space<vmem>>, vector<1x1x8x6xf32>
    %24 = vector.shape_cast %23 : vector<1x1x8x6xf32> to vector<8x6xf32>
    %cst_19 = arith.constant dense<0.000000e+00> : vector<8x256xf32>
    %25 = tpu.matmul %24, %9, %cst_19 {dimension_numbers = #tpu.dot_dimension_numbers<[1], [0], [0], [1], [0, 0, 1, 1], [], []>} : vector<8x6xf32>, vector<6x256xf32>, vector<8x256xf32> -> vector<8x256xf32>
    %26 = arith.addf %22, %25 : vector<8x256xf32>
    %c0_20 = arith.constant 0 : index
    %c2_21 = arith.constant 2 : index
    %c0_22 = arith.constant 0 : index
    %c0_23 = arith.constant 0 : index
    %27 = vector.load %arg2[%c0_20, %c2_21, %c0_22, %c0_23] : memref<3x3x8x6xf32, #tpu.memory_space<vmem>>, vector<1x1x8x6xf32>
    %28 = vector.shape_cast %27 : vector<1x1x8x6xf32> to vector<8x6xf32>
    %cst_24 = arith.constant dense<0.000000e+00> : vector<8x256xf32>
    %29 = tpu.matmul %28, %19, %cst_24 {dimension_numbers = #tpu.dot_dimension_numbers<[1], [0], [0], [1], [0, 0, 1, 1], [], []>} : vector<8x6xf32>, vector<6x256xf32>, vector<8x256xf32> -> vector<8x256xf32>
    %30 = arith.addf %26, %29 : vector<8x256xf32>
    %c0_25 = arith.constant 0 : index
    %c0_26 = arith.constant 0 : index
    %c0_27 = arith.constant 0 : index
    %31 = vector.load %arg3[%c0_25, %c0_26, %c0_27] : memref<3x8x1xf32, #tpu.memory_space<vmem>>, vector<1x8x1xf32>
    %32 = vector.shape_cast %31 : vector<1x8x1xf32> to vector<8x1xf32>
    %33 = vector.broadcast %32 : vector<8x1xf32> to vector<8x256xf32>
    %34 = arith.addf %30, %33 : vector<8x256xf32>
    %cst_28 = arith.constant 0.000000e+00 : f32
    %35 = vector.broadcast %cst_28 : f32 to vector<8x256xf32>
    %36 = arith.maximumf %34, %35 : vector<8x256xf32>
    %37 = vector.extract_strided_slice %36 {offsets = [0, 0], sizes = [4, 256], strides = [1, 1]} : vector<8x256xf32> to vector<4x256xf32>
    %c0_29 = arith.constant 0 : index
    %c2_30 = arith.constant 2 : index
    %c0_31 = arith.constant 0 : index
    %38 = vector.load %arg4[%c0_29, %c2_30, %c0_31] : memref<1x18x256xf32, #tpu.memory_space<vmem>>, vector<1x4x256xf32>
    %39 = vector.shape_cast %38 : vector<1x4x256xf32> to vector<4x256xf32>
    %40 = vector.shape_cast %37 : vector<4x256xf32> to vector<1x4x256xf32>
    tpu.vector_store %arg4[%c0_29, %c2_30, %c0_31], %40 {strides = array<i32>} : memref<1x18x256xf32, #tpu.memory_space<vmem>>, vector<1x4x256xf32>,
    %41 = vector.extract_strided_slice %36 {offsets = [4, 0], sizes = [4, 256], strides = [1, 1]} : vector<8x256xf32> to vector<4x256xf32>
    %c0_32 = arith.constant 0 : index
    %c4 = arith.constant 4 : index
    %c0_33 = arith.constant 0 : index
    %42 = vector.load %arg1[%c0_32, %c4, %c0_33] : memref<1x8x256xf32, #tpu.memory_space<vmem>>, vector<1x2x256xf32>
    %43 = vector.shape_cast %42 : vector<1x2x256xf32> to vector<2x256xf32>
    %44 = tpu.concatenate %43, %41 in 0 : vector<2x256xf32>, vector<4x256xf32> -> vector<6x256xf32>
    %c16_i32_34 = arith.constant 16 : i32
    %45 = vector.broadcast %c16_i32_34 : i32 to vector<6x256xi32>
    %46 = arith.cmpi sge, %5, %45 : vector<6x256xi32>
    %c16_i32_35 = arith.constant 16 : i32
    %47 = tpu.dynamic_rotate %44 by %c16_i32_35 dim 1 : vector<6x256xf32>, i32 -> vector<6x256xf32>
    %cst_36 = arith.constant 0.000000e+00 : f32
    %48 = vector.broadcast %cst_36 : f32 to vector<6x256xf32>
    %49 = arith.select %46, %47, %48 : vector<6x256xi1>, vector<6x256xf32>
    %c240_i32_37 = arith.constant 240 : i32
    %50 = vector.broadcast %c240_i32_37 : i32 to vector<6x256xi32>
    %51 = arith.cmpi slt, %5, %50 : vector<6x256xi32>
    %c240_i32_38 = arith.constant 240 : i32
    %52 = tpu.dynamic_rotate %44 by %c240_i32_38 dim 1 : vector<6x256xf32>, i32 -> vector<6x256xf32>
    %cst_39 = arith.constant 0.000000e+00 : f32
    %53 = vector.broadcast %cst_39 : f32 to vector<6x256xf32>
    %54 = arith.select %51, %52, %53 : vector<6x256xi1>, vector<6x256xf32>
    %c1_40 = arith.constant 1 : index
    %c0_41 = arith.constant 0 : index
    %c0_42 = arith.constant 0 : index
    %c0_43 = arith.constant 0 : index
    %55 = vector.load %arg2[%c1_40, %c0_41, %c0_42, %c0_43] : memref<3x3x8x6xf32, #tpu.memory_space<vmem>>, vector<1x1x8x6xf32>
    %56 = vector.shape_cast %55 : vector<1x1x8x6xf32> to vector<8x6xf32>
    %cst_44 = arith.constant dense<0.000000e+00> : vector<8x256xf32>
    %57 = tpu.matmul %56, %49, %cst_44 {dimension_numbers = #tpu.dot_dimension_numbers<[1], [0], [0], [1], [0, 0, 1, 1], [], []>} : vector<8x6xf32>, vector<6x256xf32>, vector<8x256xf32> -> vector<8x256xf32>
    %c1_45 = arith.constant 1 : index
    %c1_46 = arith.constant 1 : index
    %c0_47 = arith.constant 0 : index
    %c0_48 = arith.constant 0 : index
    %58 = vector.load %arg2[%c1_45, %c1_46, %c0_47, %c0_48] : memref<3x3x8x6xf32, #tpu.memory_space<vmem>>, vector<1x1x8x6xf32>
    %59 = vector.shape_cast %58 : vector<1x1x8x6xf32> to vector<8x6xf32>
    %cst_49 = arith.constant dense<0.000000e+00> : vector<8x256xf32>
    %60 = tpu.matmul %59, %44, %cst_49 {dimension_numbers = #tpu.dot_dimension_numbers<[1], [0], [0], [1], [0, 0, 1, 1], [], []>} : vector<8x6xf32>, vector<6x256xf32>, vector<8x256xf32> -> vector<8x256xf32>
    %61 = arith.addf %57, %60 : vector<8x256xf32>
    %c1_50 = arith.constant 1 : index
    %c2_51 = arith.constant 2 : index
    %c0_52 = arith.constant 0 : index
    %c0_53 = arith.constant 0 : index
    %62 = vector.load %arg2[%c1_50, %c2_51, %c0_52, %c0_53] : memref<3x3x8x6xf32, #tpu.memory_space<vmem>>, vector<1x1x8x6xf32>
    %63 = vector.shape_cast %62 : vector<1x1x8x6xf32> to vector<8x6xf32>
    %cst_54 = arith.constant dense<0.000000e+00> : vector<8x256xf32>
    %64 = tpu.matmul %63, %54, %cst_54 {dimension_numbers = #tpu.dot_dimension_numbers<[1], [0], [0], [1], [0, 0, 1, 1], [], []>} : vector<8x6xf32>, vector<6x256xf32>, vector<8x256xf32> -> vector<8x256xf32>
    %65 = arith.addf %61, %64 : vector<8x256xf32>
    %c1_55 = arith.constant 1 : index
    %c0_56 = arith.constant 0 : index
    %c0_57 = arith.constant 0 : index
    %66 = vector.load %arg3[%c1_55, %c0_56, %c0_57] : memref<3x8x1xf32, #tpu.memory_space<vmem>>, vector<1x8x1xf32>
    %67 = vector.shape_cast %66 : vector<1x8x1xf32> to vector<8x1xf32>
    %68 = vector.broadcast %67 : vector<8x1xf32> to vector<8x256xf32>
    %69 = arith.addf %65, %68 : vector<8x256xf32>
    %cst_58 = arith.constant 0.000000e+00 : f32
    %70 = vector.broadcast %cst_58 : f32 to vector<8x256xf32>
    %71 = arith.maximumf %69, %70 : vector<8x256xf32>
    %72 = vector.extract_strided_slice %71 {offsets = [0, 0], sizes = [4, 256], strides = [1, 1]} : vector<8x256xf32> to vector<4x256xf32>
    %c0_59 = arith.constant 0 : index
    %c6 = arith.constant 6 : index
    %c0_60 = arith.constant 0 : index
    %73 = vector.load %arg4[%c0_59, %c6, %c0_60] : memref<1x18x256xf32, #tpu.memory_space<vmem>>, vector<1x4x256xf32>
    %74 = vector.shape_cast %73 : vector<1x4x256xf32> to vector<4x256xf32>
    %75 = vector.shape_cast %72 : vector<4x256xf32> to vector<1x4x256xf32>
    tpu.vector_store %arg4[%c0_59, %c6, %c0_60], %75 {strides = array<i32>} : memref<1x18x256xf32, #tpu.memory_space<vmem>>, vector<1x4x256xf32>,
    %76 = vector.extract_strided_slice %71 {offsets = [4, 0], sizes = [4, 256], strides = [1, 1]} : vector<8x256xf32> to vector<4x256xf32>
    %c0_61 = arith.constant 0 : index
    %c6_62 = arith.constant 6 : index
    %c0_63 = arith.constant 0 : index
    %77 = vector.load %arg1[%c0_61, %c6_62, %c0_63] : memref<1x8x256xf32, #tpu.memory_space<vmem>>, vector<1x2x256xf32>
    %78 = vector.shape_cast %77 : vector<1x2x256xf32> to vector<2x256xf32>
    %79 = tpu.concatenate %78, %76 in 0 : vector<2x256xf32>, vector<4x256xf32> -> vector<6x256xf32>
    %c16_i32_64 = arith.constant 16 : i32
    %80 = vector.broadcast %c16_i32_64 : i32 to vector<6x256xi32>
    %81 = arith.cmpi sge, %5, %80 : vector<6x256xi32>
    %c16_i32_65 = arith.constant 16 : i32
    %82 = tpu.dynamic_rotate %79 by %c16_i32_65 dim 1 : vector<6x256xf32>, i32 -> vector<6x256xf32>
    %cst_66 = arith.constant 0.000000e+00 : f32
    %83 = vector.broadcast %cst_66 : f32 to vector<6x256xf32>
    %84 = arith.select %81, %82, %83 : vector<6x256xi1>, vector<6x256xf32>
    %c240_i32_67 = arith.constant 240 : i32
    %85 = vector.broadcast %c240_i32_67 : i32 to vector<6x256xi32>
    %86 = arith.cmpi slt, %5, %85 : vector<6x256xi32>
    %c240_i32_68 = arith.constant 240 : i32
    %87 = tpu.dynamic_rotate %79 by %c240_i32_68 dim 1 : vector<6x256xf32>, i32 -> vector<6x256xf32>
    %cst_69 = arith.constant 0.000000e+00 : f32
    %88 = vector.broadcast %cst_69 : f32 to vector<6x256xf32>
    %89 = arith.select %86, %87, %88 : vector<6x256xi1>, vector<6x256xf32>
    %c2_70 = arith.constant 2 : index
    %c0_71 = arith.constant 0 : index
    %c0_72 = arith.constant 0 : index
    %c0_73 = arith.constant 0 : index
    %90 = vector.load %arg2[%c2_70, %c0_71, %c0_72, %c0_73] : memref<3x3x8x6xf32, #tpu.memory_space<vmem>>, vector<1x1x8x6xf32>
    %91 = vector.shape_cast %90 : vector<1x1x8x6xf32> to vector<8x6xf32>
    %cst_74 = arith.constant dense<0.000000e+00> : vector<8x256xf32>
    %92 = tpu.matmul %91, %84, %cst_74 {dimension_numbers = #tpu.dot_dimension_numbers<[1], [0], [0], [1], [0, 0, 1, 1], [], []>} : vector<8x6xf32>, vector<6x256xf32>, vector<8x256xf32> -> vector<8x256xf32>
    %c2_75 = arith.constant 2 : index
    %c1_76 = arith.constant 1 : index
    %c0_77 = arith.constant 0 : index
    %c0_78 = arith.constant 0 : index
    %93 = vector.load %arg2[%c2_75, %c1_76, %c0_77, %c0_78] : memref<3x3x8x6xf32, #tpu.memory_space<vmem>>, vector<1x1x8x6xf32>
    %94 = vector.shape_cast %93 : vector<1x1x8x6xf32> to vector<8x6xf32>
    %cst_79 = arith.constant dense<0.000000e+00> : vector<8x256xf32>
    %95 = tpu.matmul %94, %79, %cst_79 {dimension_numbers = #tpu.dot_dimension_numbers<[1], [0], [0], [1], [0, 0, 1, 1], [], []>} : vector<8x6xf32>, vector<6x256xf32>, vector<8x256xf32> -> vector<8x256xf32>
    %96 = arith.addf %92, %95 : vector<8x256xf32>
    %c2_80 = arith.constant 2 : index
    %c2_81 = arith.constant 2 : index
    %c0_82 = arith.constant 0 : index
    %c0_83 = arith.constant 0 : index
    %97 = vector.load %arg2[%c2_80, %c2_81, %c0_82, %c0_83] : memref<3x3x8x6xf32, #tpu.memory_space<vmem>>, vector<1x1x8x6xf32>
    %98 = vector.shape_cast %97 : vector<1x1x8x6xf32> to vector<8x6xf32>
    %cst_84 = arith.constant dense<0.000000e+00> : vector<8x256xf32>
    %99 = tpu.matmul %98, %89, %cst_84 {dimension_numbers = #tpu.dot_dimension_numbers<[1], [0], [0], [1], [0, 0, 1, 1], [], []>} : vector<8x6xf32>, vector<6x256xf32>, vector<8x256xf32> -> vector<8x256xf32>
    %100 = arith.addf %96, %99 : vector<8x256xf32>
    %c2_85 = arith.constant 2 : index
    %c0_86 = arith.constant 0 : index
    %c0_87 = arith.constant 0 : index
    %101 = vector.load %arg3[%c2_85, %c0_86, %c0_87] : memref<3x8x1xf32, #tpu.memory_space<vmem>>, vector<1x8x1xf32>
    %102 = vector.shape_cast %101 : vector<1x8x1xf32> to vector<8x1xf32>
    %103 = vector.broadcast %102 : vector<8x1xf32> to vector<8x256xf32>
    %104 = arith.addf %100, %103 : vector<8x256xf32>
    %cst_88 = arith.constant 0.000000e+00 : f32
    %105 = vector.broadcast %cst_88 : f32 to vector<8x256xf32>
    %106 = arith.maximumf %104, %105 : vector<8x256xf32>
    %c0_89 = arith.constant 0 : index
    %c10 = arith.constant 10 : index
    %c0_90 = arith.constant 0 : index
    %107 = vector.load %arg4[%c0_89, %c10, %c0_90] : memref<1x18x256xf32, #tpu.memory_space<vmem>>, vector<1x8x256xf32>
    %108 = vector.shape_cast %107 : vector<1x8x256xf32> to vector<8x256xf32>
    %109 = vector.shape_cast %106 : vector<8x256xf32> to vector<1x8x256xf32>
    tpu.vector_store %arg4[%c0_89, %c10, %c0_90], %109 {strides = array<i32>} : memref<1x18x256xf32, #tpu.memory_space<vmem>>, vector<1x8x256xf32>,
    return
  }
  func.func @transform_0(%arg0: i32) -> (i32, i32, i32) {
    %c0_i32 = arith.constant 0 : i32
    %c0_i32_0 = arith.constant 0 : i32
    %c0_i32_1 = arith.constant 0 : i32
    return %arg0, %c0_i32, %c0_i32_0 : i32, i32, i32
  }
  func.func @transform_1(%arg0: i32) -> (i32, i32, i32, i32) {
    %c0_i32 = arith.constant 0 : i32
    %c0_i32_0 = arith.constant 0 : i32
    %c0_i32_1 = arith.constant 0 : i32
    %c0_i32_2 = arith.constant 0 : i32
    %c0_i32_3 = arith.constant 0 : i32
    return %c0_i32, %c0_i32_0, %c0_i32_1, %c0_i32_2 : i32, i32, i32, i32
  }
  func.func @transform_2(%arg0: i32) -> (i32, i32, i32) {
    %c0_i32 = arith.constant 0 : i32
    %c0_i32_0 = arith.constant 0 : i32
    %c0_i32_1 = arith.constant 0 : i32
    %c0_i32_2 = arith.constant 0 : i32
    return %c0_i32, %c0_i32_0, %c0_i32_1 : i32, i32, i32
  }
  func.func @transform_3(%arg0: i32) -> (i32, i32, i32) {
    %c0_i32 = arith.constant 0 : i32
    %c0_i32_0 = arith.constant 0 : i32
    %c0_i32_1 = arith.constant 0 : i32
    return %arg0, %c0_i32, %c0_i32_0 : i32, i32, i32
  }
}

</mosaic_0001>

<llo_original>
// kernel: hs_block_forward.1
$region0: #{hs_block_forward.1}
  #allocation0 [shape = 'u32[]', space=smem, size = 0x4, offset = 0x4, fixed_abs, tag = 'smem constant byte address 0x4 - core index']
  #allocation1 [shape = 'u32[144,128]{1,0:T(1,128)}', space=vmem, size = 0x12000, scoped, tag = 'internal scratch']
  %s0 = inlined_call_operand.vmem [shape: f32[2,8,256], index: 0, kind: input, shape index: {}]
  %s1 = inlined_call_operand.vmem [shape: f32[3,3,8,6], index: 1, kind: input, shape index: {}]
  %s2 = inlined_call_operand.vmem [shape: f32[3,8,1], index: 2, kind: input, shape index: {}]
  %s3 = inlined_call_operand.vmem [shape: f32[2,18,256], index: 3, kind: output, shape index: {}]
  %s4 = sld [smem:[#allocation0]]
  $region45: #{hs_block_forward.1} parent=0
    _
  %s6 = ssub.s32 1, %s4
  %s7 = scalar_select 0, %s6, %s4
  loop: start=0, step=1, limit=4
  $region2: #{hs_block_forward.1} parent=0 // loop_pre_header
    _
  $region3: #{hs_block_forward.1} parent=0 // loop_header
    %s9 = sphi 0, %s13
    %p10 = scmp.ge.s32.totalorder %s9, 4
    %s19 = sphi 0, %s21
    %s22 = sphi 0, %s19
    %s23 = sphi 0, %s22
    %s39 = sphi 0, %s23
    %s43 = sphi 0, %s43
    %s45 = sphi 0, %s43
    %s46 = sphi 0, %s45
    %s60 = sphi 0, %s46
    %s64 = sphi 0, %s64
    %s66 = sphi 0, %s64
    %s67 = sphi 0, %s66
    %s81 = sphi 0, %s67
    %s87 = sphi 0, %s89
    %s90 = sphi 0, %s87
    %s91 = sphi 0, %s90
    %s107 = sphi 0, %s91
  $region4: #{hs_block_forward.1} parent=0 // loop_header_branch
    %12 = sbr.rel (%p10) target = $region8
  $region5: #{hs_block_forward.1} parent=0 // loop_body
    %s14 = ssub.s32 %s9, 1
    %s15 = ssub.s32 %s9, 2
    %s16 = sadd.s32 %s9, 1
    %s17 = ssub.s32 %s9, %s16
    %p18 = scmp.eq.s32.totalorder %s17, 0
    %s20 = sadd.s32 %s19, 1
    %s21 = scalar_select %p18, %s19, %s20
    %p24 = pneg %p18
    %p25 = scmp.eq.s32.totalorder %s9, 1
    %p26 = por %p24, %p25
    %p27 = scmp.ne.s32.totalorder %s19, %s22
    %p28 = scmp.eq.s32.totalorder %s9, 0
    %p29 = por %p27, %p28
    %p30 = scmp.ne.s32.totalorder %s19, %s22
    %p31 = scmp.eq.s32.totalorder %s14, 1
    %p32 = por %p30, %p31
    %p33 = scmp.ne.s32.totalorder %s22, %s23
    %p34 = scmp.eq.s32.totalorder %s14, 0
    %p35 = por %p33, %p34
    %p36 = scmp.ne.s32.totalorder %s22, %s23
    %p37 = scmp.eq.s32.totalorder %s15, 1
    %p38 = por %p36, %p37
    %p40 = scmp.ne.s32.totalorder %s23, %s39
    %p41 = scmp.eq.s32.totalorder %s15, 0
    %p42 = por %p40, %p41
    %s44 = sadd.s32 %s43, 1
    %p47 = scmp.eq.s32.totalorder %s9, 1
    %p48 = scmp.ne.s32.totalorder %s43, %s45
    %p49 = scmp.eq.s32.totalorder %s9, 0
    %p50 = por %p48, %p49
    %p51 = scmp.ne.s32.totalorder %s43, %s45
    %p52 = scmp.eq.s32.totalorder %s14, 1
    %p53 = por %p51, %p52
    %p54 = scmp.ne.s32.totalorder %s45, %s46
    %p55 = scmp.eq.s32.totalorder %s14, 0
    %p56 = por %p54, %p55
    %p57 = scmp.ne.s32.totalorder %s45, %s46
    %p58 = scmp.eq.s32.totalorder %s15, 1
    %p59 = por %p57, %p58
    %p61 = scmp.ne.s32.totalorder %s46, %s60
    %p62 = scmp.eq.s32.totalorder %s15, 0
    %p63 = por %p61, %p62
    %s65 = sadd.s32 %s64, 1
    %p68 = scmp.eq.s32.totalorder %s9, 1
    %p69 = scmp.ne.s32.totalorder %s64, %s66
    %p70 = scmp.eq.s32.totalorder %s9, 0
    %p71 = por %p69, %p70
    %p72 = scmp.ne.s32.totalorder %s64, %s66
    %p73 = scmp.eq.s32.totalorder %s14, 1
    %p74 = por %p72, %p73
    %p75 = scmp.ne.s32.totalorder %s66, %s67
    %p76 = scmp.eq.s32.totalorder %s14, 0
    %p77 = por %p75, %p76
    %p78 = scmp.ne.s32.totalorder %s66, %s67
    %p79 = scmp.eq.s32.totalorder %s15, 1
    %p80 = por %p78, %p79
    %p82 = scmp.ne.s32.totalorder %s67, %s81
    %p83 = scmp.eq.s32.totalorder %s15, 0
    %p84 = por %p82, %p83
    %s85 = ssub.s32 %s9, %s16
    %p86 = scmp.eq.s32.totalorder %s85, 0
    %s88 = sadd.s32 %s87, 1
    %s89 = scalar_select %p86, %s87, %s88
    %p92 = pneg %p86
    %p93 = scmp.eq.s32.totalorder %s9, 1
    %p94 = por %p92, %p93
    %p95 = scmp.ne.s32.totalorder %s87, %s90
    %p96 = scmp.eq.s32.totalorder %s9, 0
    %p97 = por %p95, %p96
    %p98 = scmp.ne.s32.totalorder %s87, %s90
    %p99 = scmp.eq.s32.totalorder %s14, 1
    %p100 = por %p98, %p99
    %p101 = scmp.ne.s32.totalorder %s90, %s91
    %p102 = scmp.eq.s32.totalorder %s14, 0
    %p103 = por %p101, %p102
    %p104 = scmp.ne.s32.totalorder %s90, %s91
    %p105 = scmp.eq.s32.totalorder %s15, 1
    %p106 = por %p104, %p105
    %p108 = scmp.ne.s32.totalorder %s91, %s107
    %p109 = scmp.eq.s32.totalorder %s15, 0
    %p110 = por %p108, %p109
    %p111 = scmp.le.s32.totalorder 1, %s9
    %p112 = scmp.lt.s32.totalorder %s9, 3
    %p113 = pnand %p111, %p112
    %p114 = pneg %p113
    // Predicated region
    $region9: #{hs_block_forward.1} parent=5 // pred_check
      _
    $region10: #{hs_block_forward.1} parent=5 // pred_check_branch
      %116 = sbr.rel (%p113) target = $region12
    $region11: #{hs_block_forward.1} parent=5 // pred_region
      %s117 = ssub.s32 %s9, 1
      // Predicated region
      $region13: #{hs_block_forward.1} parent=11 // pred_check
        %p118 = pneg %p56
      $region14: #{hs_block_forward.1} parent=11 // pred_check_branch
        %120 = sbr.rel (%p118) target = $region16
      $region15: #{hs_block_forward.1} parent=11 // pred_region
        _
      $region16: #{hs_block_forward.1} parent=11 // pred_fallthru
        _
      // Predicated region
      $region17: #{hs_block_forward.1} parent=11 // pred_check
        %p121 = pneg %p77
      $region18: #{hs_block_forward.1} parent=11 // pred_check_branch
        %123 = sbr.rel (%p121) target = $region20
      $region19: #{hs_block_forward.1} parent=11 // pred_region
        _
      $region20: #{hs_block_forward.1} parent=11 // pred_fallthru
        _
    $region12: #{hs_block_forward.1} parent=5 // pred_fallthru
      _
    %p124 = scmp.lt.s32.totalorder %s9, 2
    // Predicated region
    $region21: #{hs_block_forward.1} parent=5 // pred_check
      %p125 = pneg %p124
    $region22: #{hs_block_forward.1} parent=5 // pred_check_branch
      %127 = sbr.rel (%p125) target = $region24
    $region23: #{hs_block_forward.1} parent=5 // pred_region
      // Predicated region
      $region25: #{hs_block_forward.1} parent=23 // pred_check
        %p128 = pneg %p29
      $region26: #{hs_block_forward.1} parent=23 // pred_check_branch
        %130 = sbr.rel (%p128) target = $region28
      $region27: #{hs_block_forward.1} parent=23 // pred_region
        %p131 = scmp.lt.s32.totalorder %s9, 1
        %s132 = scalar_select %p131, %s9, 1
        %s133 = smul.addr %s132, 2
        %s134 = smul.addr %s133, 8
        %s135 = scalar_lea.vmem %s0, %s134
      $region28: #{hs_block_forward.1} parent=23 // pred_fallthru
        _
    $region24: #{hs_block_forward.1} parent=5 // pred_fallthru
      _
    %p136 = scmp.le.s32.totalorder 1, %s9
    %p137 = scmp.lt.s32.totalorder %s9, 3
    %p138 = pnand %p136, %p137
    %p139 = pneg %p138
    // Predicated region
    $region29: #{hs_block_forward.1} parent=5 // pred_check
      _
    $region30: #{hs_block_forward.1} parent=5 // pred_check_branch
      %141 = sbr.rel (%p138) target = $region32
    $region31: #{hs_block_forward.1} parent=5 // pred_region
      %s142 = ssub.s32 %s9, 1
      %p143 = scmp.lt.s32.totalorder %s14, 1
      %s144 = scalar_select %p143, %s14, 1
      %s145 = smul.addr %s144, 2
      %s146 = smul.addr %s145, 8
      %s147 = scalar_lea.vmem %s0, %s146
      %p148 = pneg %p35
      %p149 = pneg %p32
      %p150 = pneg %p56
      %p151 = pneg %p53
      %p152 = pneg %p77
      %p153 = pneg %p74
      %p154 = pneg %p103
      %p155 = pneg %p100
      %p156 = scmp.lt.s32.totalorder %s14, 1
      %s157 = scalar_select %p156, %s14, 1
      %s158 = smul.addr %s157, 6
      %s159 = smul.addr %s158, 8
      %s160 = scalar_lea.vmem %s3, %s159
      %p161 = scmp.lt.s32.totalorder %s14, 1
      %s162 = scalar_select %p161, %s14, 1
      %s163 = smul.addr %s162, 2
      %s164 = smul.addr %s163, 8
      %s165 = scalar_lea.vmem %s0, %s164
      %p166 = scmp.lt.s32.totalorder %s14, 1
      %s167 = scalar_select %p166, %s14, 1
      %s168 = smul.addr %s167, 6
      %s169 = smul.addr %s168, 8
      %s170 = scalar_lea.vmem %s3, %s169
      %v171 = vld [vmem:[%s165] sm:$0x3]
      %v172 = vld [vmem:[%s165 + $0x8] sm:$0x3]
      %173 = vst [vmem:[%s170] sm:$0x3] %v171
      %174 = vst [vmem:[%s170 + $0x8] sm:$0x3] %v172
      %v175 = vlaneseq
      %v176 = vand.u32 %v175, 127
      %v177 = vadd.s32 %v176, 128
      %v178 = vld [vmem:[%s165] sm:$0xc]
      %v179 = vld [vmem:[%s165 + $0x8] sm:$0xc]
      %v182 = vrot.slane %v178, 2
      %v183 = vrot.slane %v179, 2
      %vm186 = vcmask 1041408
      %v187 = vsel %vm186, %v182, 0.0
      %v188 = vsel %vm186, %v183, 0.0
      %vm189 = vcmp.ge.s32.totalorder %v176, 16
      %vm190 = vcmp.ge.s32.totalorder %v177, 16
      %191 = vrot.lane.b32.xlu0 %v187, 16
      %v192 = vpop.permute.xlu0 %191
      %193 = vrot.lane.b32.xlu0 %v188, 16
      %v194 = vpop.permute.xlu0 %193
      %vm195 = vcmp.lt.s32.totalorder %v176, 16
      %v196 = vsel %vm195, %v192, %v194
      %v197 = vsel %vm195, %v194, %v192
      %v198 = vsel %vm189, %v197, 0.0
      %v199 = vsel %vm190, %v196, 0.0
      %vm200 = vcmp.lt.s32.totalorder %v176, 240
      %vm201 = vcmp.lt.s32.totalorder %v177, 240
      %202 = vrot.lane.b32.xlu0 %v187, 112
      %v203 = vpop.permute.xlu0 %202
      %204 = vrot.lane.b32.xlu0 %v188, 112
      %v205 = vpop.permute.xlu0 %204
      %vm206 = vcmp.lt.s32.totalorder %v176, 112
      %v207 = vsel %vm206, %v203, %v205
      %v208 = vsel %vm206, %v205, %v203
      %v209 = vsel %vm200, %v207, 0.0
      %v210 = vsel %vm201, %v208, 0.0
      %v211 = vld [vmem:[%s1] sm:$0xff]
      %s212 = scalar_lea.vmem %s1, 8
      %v213 = vld [vmem:[%s212] sm:$0xff]
      %vm214 = vcmask 48128
      %v216 = vsel %vm214, %v213, 0
      %vm218 = vcmask 1045504
      %v220 = vsel %vm218, %v187, 0
      %v223 = vsel %vm218, %v188, 0
      %225 = vmatprep.subr.mxu0 %v223
      %226 = vmatpush1.msra.mxu0 %v220
      %227 = vmatprep.subr.mxu0 0.0
      %228 = vmatpush1.msra.mxu0 0.0
      %229 = vmatprep.subr.mxu0 0.0
      %230 = vmatpush1.msra.mxu0 0.0
      %231 = vmatprep.subr.mxu0 0.0
      %232 = vmatpush1.msra.mxu0 0.0
      %233 = vmatprep.subr.mxu0 0.0
      %234 = vmatpush1.msra.mxu0 0.0
      %235 = vmatprep.subr.mxu0 0.0
      %236 = vmatpush1.msra.mxu0 0.0
      %237 = vmatprep.subr.mxu0 0.0
      %238 = vmatpush1.msra.mxu0 0.0
      %239 = vmatprep.subr.mxu0 0.0
      %240 = vmatpush1.msra.mxu0 0.0
      %241 = vmatprep.subr.mxu0 0.0
      %242 = vmatpush1.msra.mxu0 0.0
      %243 = vmatprep.subr.mxu0 0.0
      %244 = vmatpush1.msra.mxu0 0.0
      %245 = vmatprep.subr.mxu0 0.0
      %246 = vmatpush1.msra.mxu0 0.0
      %247 = vmatprep.subr.mxu0 0.0
      %248 = vmatpush1.msra.mxu0 0.0
      %249 = vmatprep.subr.mxu0 0.0
      %250 = vmatpush1.msra.mxu0 0.0
      %251 = vmatprep.subr.mxu0 0.0
      %252 = vmatpush1.msra.mxu0 0.0
      %253 = vmatprep.subr.mxu0 0.0
      %254 = vmatpush1.msra.mxu0 0.0
      %255 = vmatprep.subr.mxu0 0.0
      %256 = vmatpush1.msra.mxu0 0.0
      %257 = vmatprep.subr.mxu0 0.0
      %258 = vmatpush1.msra.mxu0 0.0
      %259 = vmatprep.subr.mxu0 0.0
      %260 = vmatpush1.msra.mxu0 0.0
      %261 = vmatprep.subr.mxu0 0.0
      %262 = vmatpush1.msra.mxu0 0.0
      %263 = vmatprep.subr.mxu0 0.0
      %264 = vmatpush1.msra.mxu0 0.0
      %265 = vmatprep.subr.mxu0 0.0
      %266 = vmatpush1.msra.mxu0 0.0
      %267 = vmatprep.subr.mxu0 0.0
      %268 = vmatpush1.msra.mxu0 0.0
      %269 = vmatprep.subr.mxu0 0.0
      %270 = vmatpush1.msra.mxu0 0.0
      %271 = vmatprep.subr.mxu0 0.0
      %272 = vmatpush1.msra.mxu0 0.0
      %273 = vmatprep.subr.mxu0 0.0
      %274 = vmatpush1.msra.mxu0 0.0
      %275 = vmatprep.subr.mxu0 0.0
      %276 = vmatpush1.msra.mxu0 0.0
      %277 = vmatprep.subr.mxu0 0.0
      %278 = vmatpush1.msra.mxu0 0.0
      %279 = vmatprep.subr.mxu0 0.0
      %280 = vmatpush1.msra.mxu0 0.0
      %281 = vmatprep.subr.mxu0 0.0
      %282 = vmatpush1.msra.mxu0 0.0
      %283 = vmatprep.subr.mxu0 0.0
      %284 = vmatpush1.msra.mxu0 0.0
      %285 = vmatprep.subr.mxu0 0.0
      %286 = vmatpush1.msra.mxu0 0.0
      %287 = vmatprep.subr.mxu0 0.0
      %288 = vmatpush1.msra.mxu0 0.0
      %289 = vmatprep.mubr.f32.mxu0 0.0
      %290 = vmatmul.mubr.f32.gmra.mrb[0].mxu0 %v216
      %v291 = vpop.f32.mrb[0].mxu0
      %v292 = vadd.f32 0.0, %v291
      %v293 = vpop.f32.mrb[0].mxu0
      %v294 = vadd.f32 0.0, %v293
      %295 = vdwg.mxu0
      %v297 = vsel %vm214, %v211, 0
      %v300 = vsel %vm218, %v198, 0
      %v303 = vsel %vm218, %v199, 0
      %305 = vmatprep.subr.mxu0 %v303
      %306 = vmatpush1.msra.mxu0 %v300
      %307 = vmatprep.subr.mxu0 0.0
      %308 = vmatpush1.msra.mxu0 0.0
      %309 = vmatprep.subr.mxu0 0.0
      %310 = vmatpush1.msra.mxu0 0.0
      %311 = vmatprep.subr.mxu0 0.0
      %312 = vmatpush1.msra.mxu0 0.0
      %313 = vmatprep.subr.mxu0 0.0
      %314 = vmatpush1.msra.mxu0 0.0
      %315 = vmatprep.subr.mxu0 0.0
      %316 = vmatpush1.msra.mxu0 0.0
      %317 = vmatprep.subr.mxu0 0.0
      %318 = vmatpush1.msra.mxu0 0.0
      %319 = vmatprep.subr.mxu0 0.0
      %320 = vmatpush1.msra.mxu0 0.0
      %321 = vmatprep.subr.mxu0 0.0
      %322 = vmatpush1.msra.mxu0 0.0
      %323 = vmatprep.subr.mxu0 0.0
      %324 = vmatpush1.msra.mxu0 0.0
      %325 = vmatprep.subr.mxu0 0.0
      %326 = vmatpush1.msra.mxu0 0.0
      %327 = vmatprep.subr.mxu0 0.0
      %328 = vmatpush1.msra.mxu0 0.0
      %329 = vmatprep.subr.mxu0 0.0
      %330 = vmatpush1.msra.mxu0 0.0
      %331 = vmatprep.subr.mxu0 0.0
      %332 = vmatpush1.msra.mxu0 0.0
      %333 = vmatprep.subr.mxu0 0.0
      %334 = vmatpush1.msra.mxu0 0.0
      %335 = vmatprep.subr.mxu0 0.0
      %336 = vmatpush1.msra.mxu0 0.0
      %337 = vmatprep.subr.mxu0 0.0
      %338 = vmatpush1.msra.mxu0 0.0
      %339 = vmatprep.subr.mxu0 0.0
      %340 = vmatpush1.msra.mxu0 0.0
      %341 = vmatprep.subr.mxu0 0.0
      %342 = vmatpush1.msra.mxu0 0.0
      %343 = vmatprep.subr.mxu0 0.0
      %344 = vmatpush1.msra.mxu0 0.0
      %345 = vmatprep.subr.mxu0 0.0
      %346 = vmatpush1.msra.mxu0 0.0
      %347 = vmatprep.subr.mxu0 0.0
      %348 = vmatpush1.msra.mxu0 0.0
      %349 = vmatprep.subr.mxu0 0.0
      %350 = vmatpush1.msra.mxu0 0.0
      %351 = vmatprep.subr.mxu0 0.0
      %352 = vmatpush1.msra.mxu0 0.0
      %353 = vmatprep.subr.mxu0 0.0
      %354 = vmatpush1.msra.mxu0 0.0
      %355 = vmatprep.subr.mxu0 0.0
      %356 = vmatpush1.msra.mxu0 0.0
      %357 = vmatprep.subr.mxu0 0.0
      %358 = vmatpush1.msra.mxu0 0.0
      %359 = vmatprep.subr.mxu0 0.0
      %360 = vmatpush1.msra.mxu0 0.0
      %361 = vmatprep.subr.mxu0 0.0
      %362 = vmatpush1.msra.mxu0 0.0
      %363 = vmatprep.subr.mxu0 0.0
      %364 = vmatpush1.msra.mxu0 0.0
      %365 = vmatprep.subr.mxu0 0.0
      %366 = vmatpush1.msra.mxu0 0.0
      %367 = vmatprep.subr.mxu0 0.0
      %368 = vmatpush1.msra.mxu0 0.0
      %369 = vmatprep.mubr.f32.mxu0 0.0
      %370 = vmatmul.mubr.f32.gmra.mrb[0].mxu0 %v297
      %v371 = vpop.f32.mrb[0].mxu0
      %v372 = vadd.f32 %v292, %v371
      %v373 = vpop.f32.mrb[0].mxu0
      %v374 = vadd.f32 %v294, %v373
      %375 = vdwg.mxu0
      %s376 = scalar_lea.vmem %s1, 16
      %v377 = vld [vmem:[%s376] sm:$0xff]
      %v379 = vsel %vm214, %v377, 0
      %v382 = vsel %vm218, %v209, 0
      %v385 = vsel %vm218, %v210, 0
      %387 = vmatprep.subr.mxu0 %v385
      %388 = vmatpush1.msra.mxu0 %v382
      %389 = vmatprep.subr.mxu0 0.0
      %390 = vmatpush1.msra.mxu0 0.0
      %391 = vmatprep.subr.mxu0 0.0
      %392 = vmatpush1.msra.mxu0 0.0
      %393 = vmatprep.subr.mxu0 0.0
      %394 = vmatpush1.msra.mxu0 0.0
      %395 = vmatprep.subr.mxu0 0.0
      %396 = vmatpush1.msra.mxu0 0.0
      %397 = vmatprep.subr.mxu0 0.0
      %398 = vmatpush1.msra.mxu0 0.0
      %399 = vmatprep.subr.mxu0 0.0
      %400 = vmatpush1.msra.mxu0 0.0
      %401 = vmatprep.subr.mxu0 0.0
      %402 = vmatpush1.msra.mxu0 0.0
      %403 = vmatprep.subr.mxu0 0.0
      %404 = vmatpush1.msra.mxu0 0.0
      %405 = vmatprep.subr.mxu0 0.0
      %406 = vmatpush1.msra.mxu0 0.0
      %407 = vmatprep.subr.mxu0 0.0
      %408 = vmatpush1.msra.mxu0 0.0
      %409 = vmatprep.subr.mxu0 0.0
      %410 = vmatpush1.msra.mxu0 0.0
      %411 = vmatprep.subr.mxu0 0.0
      %412 = vmatpush1.msra.mxu0 0.0
      %413 = vmatprep.subr.mxu0 0.0
      %414 = vmatpush1.msra.mxu0 0.0
      %415 = vmatprep.subr.mxu0 0.0
      %416 = vmatpush1.msra.mxu0 0.0
      %417 = vmatprep.subr.mxu0 0.0
      %418 = vmatpush1.msra.mxu0 0.0
      %419 = vmatprep.subr.mxu0 0.0
      %420 = vmatpush1.msra.mxu0 0.0
      %421 = vmatprep.subr.mxu0 0.0
      %422 = vmatpush1.msra.mxu0 0.0
      %423 = vmatprep.subr.mxu0 0.0
      %424 = vmatpush1.msra.mxu0 0.0
      %425 = vmatprep.subr.mxu0 0.0
      %426 = vmatpush1.msra.mxu0 0.0
      %427 = vmatprep.subr.mxu0 0.0
      %428 = vmatpush1.msra.mxu0 0.0
      %429 = vmatprep.subr.mxu0 0.0
      %430 = vmatpush1.msra.mxu0 0.0
      %431 = vmatprep.subr.mxu0 0.0
      %432 = vmatpush1.msra.mxu0 0.0
      %433 = vmatprep.subr.mxu0 0.0
      %434 = vmatpush1.msra.mxu0 0.0
      %435 = vmatprep.subr.mxu0 0.0
      %436 = vmatpush1.msra.mxu0 0.0
      %437 = vmatprep.subr.mxu0 0.0
      %438 = vmatpush1.msra.mxu0 0.0
      %439 = vmatprep.subr.mxu0 0.0
      %440 = vmatpush1.msra.mxu0 0.0
      %441 = vmatprep.subr.mxu0 0.0
      %442 = vmatpush1.msra.mxu0 0.0
      %443 = vmatprep.subr.mxu0 0.0
      %444 = vmatpush1.msra.mxu0 0.0
      %445 = vmatprep.subr.mxu0 0.0
      %446 = vmatpush1.msra.mxu0 0.0
      %447 = vmatprep.subr.mxu0 0.0
      %448 = vmatpush1.msra.mxu0 0.0
      %449 = vmatprep.subr.mxu0 0.0
      %450 = vmatpush1.msra.mxu0 0.0
      %451 = vmatprep.mubr.f32.mxu0 0.0
      %452 = vmatmul.mubr.f32.gmra.mrb[0].mxu0 %v379
      %v453 = vpop.f32.mrb[0].mxu0
      %v454 = vadd.f32 0.0, %v453
      %v455 = vpop.f32.mrb[0].mxu0
      %v456 = vadd.f32 0.0, %v455
      %457 = vdwg.mxu0
      %v458 = vadd.f32 %v372, %v454
      %v459 = vadd.f32 %v374, %v456
      %v460 = vld [vmem:[%s2] sm:$0xff]
      %462 = vset.pattern.permute.xlu0 0
      %463 = vperm.xlu0 %462, %v460
      %v464 = vpop.permute.xlu0 %463
      %v466 = vadd.f32 %v458, %v464
      %v467 = vadd.f32 %v459, %v464
      %v468 = vmax.f32 %v466, 0.0
      %v469 = vmax.f32 %v467, 0.0
      %v472 = vrot.slane %v468, 6
      %v473 = vrot.slane %v469, 6
      %476 = vst [vmem:[%s170] sm:$0x3c] %v472
      %477 = vst [vmem:[%s170 + $0x8] sm:$0x3c] %v473
      %v478 = vld [vmem:[%s165] sm:$0x30]
      %v479 = vld [vmem:[%s165 + $0x8] sm:$0x30]
      %v482 = vrot.slane %v478, 4
      %v483 = vrot.slane %v479, 4
      %v486 = vrot.slane %v468, 2
      %v487 = vrot.slane %v469, 2
      %v490 = vsel %vm186, %v482, %v486
      %v491 = vsel %vm186, %v483, %v487
      %492 = vrot.lane.b32.xlu0 %v490, 16
      %v493 = vpop.permute.xlu0 %492
      %494 = vrot.lane.b32.xlu0 %v491, 16
      %v495 = vpop.permute.xlu0 %494
      %v496 = vsel %vm195, %v493, %v495
      %v497 = vsel %vm195, %v495, %v493
      %v498 = vsel %vm189, %v497, 0.0
      %v499 = vsel %vm190, %v496, 0.0
      %500 = vrot.lane.b32.xlu0 %v490, 112
      %v501 = vpop.permute.xlu0 %500
      %502 = vrot.lane.b32.xlu0 %v491, 112
      %v503 = vpop.permute.xlu0 %502
      %v504 = vsel %vm206, %v501, %v503
      %v505 = vsel %vm206, %v503, %v501
      %v506 = vsel %vm200, %v504, 0.0
      %v507 = vsel %vm201, %v505, 0.0
      %s508 = scalar_lea.vmem %s1, 24
      %v509 = vld [vmem:[%s508] sm:$0xff]
      %s510 = scalar_lea.vmem %s1, 32
      %v511 = vld [vmem:[%s510] sm:$0xff]
      %v513 = vsel %vm214, %v511, 0
      %v516 = vsel %vm218, %v490, 0
      %v519 = vsel %vm218, %v491, 0
      %521 = vmatprep.subr.mxu0 %v519
      %522 = vmatpush1.msra.mxu0 %v516
      %523 = vmatprep.subr.mxu0 0.0
      %524 = vmatpush1.msra.mxu0 0.0
      %525 = vmatprep.subr.mxu0 0.0
      %526 = vmatpush1.msra.mxu0 0.0
      %527 = vmatprep.subr.mxu0 0.0
      %528 = vmatpush1.msra.mxu0 0.0
      %529 = vmatprep.subr.mxu0 0.0
      %530 = vmatpush1.msra.mxu0 0.0
      %531 = vmatprep.subr.mxu0 0.0
      %532 = vmatpush1.msra.mxu0 0.0
      %533 = vmatprep.subr.mxu0 0.0
      %534 = vmatpush1.msra.mxu0 0.0
      %535 = vmatprep.subr.mxu0 0.0
      %536 = vmatpush1.msra.mxu0 0.0
      %537 = vmatprep.subr.mxu0 0.0
      %538 = vmatpush1.msra.mxu0 0.0
      %539 = vmatprep.subr.mxu0 0.0
      %540 = vmatpush1.msra.mxu0 0.0
      %541 = vmatprep.subr.mxu0 0.0
      %542 = vmatpush1.msra.mxu0 0.0
      %543 = vmatprep.subr.mxu0 0.0
      %544 = vmatpush1.msra.mxu0 0.0
      %545 = vmatprep.subr.mxu0 0.0
      %546 = vmatpush1.msra.mxu0 0.0
      %547 = vmatprep.subr.mxu0 0.0
      %548 = vmatpush1.msra.mxu0 0.0
      %549 = vmatprep.subr.mxu0 0.0
      %550 = vmatpush1.msra.mxu0 0.0
      %551 = vmatprep.subr.mxu0 0.0
      %552 = vmatpush1.msra.mxu0 0.0
      %553 = vmatprep.subr.mxu0 0.0
      %554 = vmatpush1.msra.mxu0 0.0
      %555 = vmatprep.subr.mxu0 0.0
      %556 = vmatpush1.msra.mxu0 0.0
      %557 = vmatprep.subr.mxu0 0.0
      %558 = vmatpush1.msra.mxu0 0.0
      %559 = vmatprep.subr.mxu0 0.0
      %560 = vmatpush1.msra.mxu0 0.0
      %561 = vmatprep.subr.mxu0 0.0
      %562 = vmatpush1.msra.mxu0 0.0
      %563 = vmatprep.subr.mxu0 0.0
      %564 = vmatpush1.msra.mxu0 0.0
      %565 = vmatprep.subr.mxu0 0.0
      %566 = vmatpush1.msra.mxu0 0.0
      %567 = vmatprep.subr.mxu0 0.0
      %568 = vmatpush1.msra.mxu0 0.0
      %569 = vmatprep.subr.mxu0 0.0
      %570 = vmatpush1.msra.mxu0 0.0
      %571 = vmatprep.subr.mxu0 0.0
      %572 = vmatpush1.msra.mxu0 0.0
      %573 = vmatprep.subr.mxu0 0.0
      %574 = vmatpush1.msra.mxu0 0.0
      %575 = vmatprep.subr.mxu0 0.0
      %576 = vmatpush1.msra.mxu0 0.0
      %577 = vmatprep.subr.mxu0 0.0
      %578 = vmatpush1.msra.mxu0 0.0
      %579 = vmatprep.subr.mxu0 0.0
      %580 = vmatpush1.msra.mxu0 0.0
      %581 = vmatprep.subr.mxu0 0.0
      %582 = vmatpush1.msra.mxu0 0.0
      %583 = vmatprep.subr.mxu0 0.0
      %584 = vmatpush1.msra.mxu0 0.0
      %585 = vmatprep.mubr.f32.mxu0 0.0
      %586 = vmatmul.mubr.f32.gmra.mrb[0].mxu0 %v513
      %v587 = vpop.f32.mrb[0].mxu0
      %v588 = vadd.f32 0.0, %v587
      %v589 = vpop.f32.mrb[0].mxu0
      %v590 = vadd.f32 0.0, %v589
      %591 = vdwg.mxu0
      %v593 = vsel %vm214, %v509, 0
      %v596 = vsel %vm218, %v498, 0
      %v599 = vsel %vm218, %v499, 0
      %601 = vmatprep.subr.mxu0 %v599
      %602 = vmatpush1.msra.mxu0 %v596
      %603 = vmatprep.subr.mxu0 0.0
      %604 = vmatpush1.msra.mxu0 0.0
      %605 = vmatprep.subr.mxu0 0.0
      %606 = vmatpush1.msra.mxu0 0.0
      %607 = vmatprep.subr.mxu0 0.0
      %608 = vmatpush1.msra.mxu0 0.0
      %609 = vmatprep.subr.mxu0 0.0
      %610 = vmatpush1.msra.mxu0 0.0
      %611 = vmatprep.subr.mxu0 0.0
      %612 = vmatpush1.msra.mxu0 0.0
      %613 = vmatprep.subr.mxu0 0.0
      %614 = vmatpush1.msra.mxu0 0.0
      %615 = vmatprep.subr.mxu0 0.0
      %616 = vmatpush1.msra.mxu0 0.0
      %617 = vmatprep.subr.mxu0 0.0
      %618 = vmatpush1.msra.mxu0 0.0
      %619 = vmatprep.subr.mxu0 0.0
      %620 = vmatpush1.msra.mxu0 0.0
      %621 = vmatprep.subr.mxu0 0.0
      %622 = vmatpush1.msra.mxu0 0.0
      %623 = vmatprep.subr.mxu0 0.0
      %624 = vmatpush1.msra.mxu0 0.0
      %625 = vmatprep.subr.mxu0 0.0
      %626 = vmatpush1.msra.mxu0 0.0
      %627 = vmatprep.subr.mxu0 0.0
      %628 = vmatpush1.msra.mxu0 0.0
      %629 = vmatprep.subr.mxu0 0.0
      %630 = vmatpush1.msra.mxu0 0.0
      %631 = vmatprep.subr.mxu0 0.0
      %632 = vmatpush1.msra.mxu0 0.0
      %633 = vmatprep.subr.mxu0 0.0
      %634 = vmatpush1.msra.mxu0 0.0
      %635 = vmatprep.subr.mxu0 0.0
      %636 = vmatpush1.msra.mxu0 0.0
      %637 = vmatprep.subr.mxu0 0.0
      %638 = vmatpush1.msra.mxu0 0.0
      %639 = vmatprep.subr.mxu0 0.0
      %640 = vmatpush1.msra.mxu0 0.0
      %641 = vmatprep.subr.mxu0 0.0
      %642 = vmatpush1.msra.mxu0 0.0
      %643 = vmatprep.subr.mxu0 0.0
      %644 = vmatpush1.msra.mxu0 0.0
      %645 = vmatprep.subr.mxu0 0.0
      %646 = vmatpush1.msra.mxu0 0.0
      %647 = vmatprep.subr.mxu0 0.0
      %648 = vmatpush1.msra.mxu0 0.0
      %649 = vmatprep.subr.mxu0 0.0
      %650 = vmatpush1.msra.mxu0 0.0
      %651 = vmatprep.subr.mxu0 0.0
      %652 = vmatpush1.msra.mxu0 0.0
      %653 = vmatprep.subr.mxu0 0.0
      %654 = vmatpush1.msra.mxu0 0.0
      %655 = vmatprep.subr.mxu0 0.0
      %656 = vmatpush1.msra.mxu0 0.0
      %657 = vmatprep.subr.mxu0 0.0
      %658 = vmatpush1.msra.mxu0 0.0
      %659 = vmatprep.subr.mxu0 0.0
      %660 = vmatpush1.msra.mxu0 0.0
      %661 = vmatprep.subr.mxu0 0.0
      %662 = vmatpush1.msra.mxu0 0.0
      %663 = vmatprep.subr.mxu0 0.0
      %664 = vmatpush1.msra.mxu0 0.0
      %665 = vmatprep.mubr.f32.mxu0 0.0
      %666 = vmatmul.mubr.f32.gmra.mrb[0].mxu0 %v593
      %v667 = vpop.f32.mrb[0].mxu0
      %v668 = vadd.f32 %v588, %v667
      %v669 = vpop.f32.mrb[0].mxu0
      %v670 = vadd.f32 %v590, %v669
      %671 = vdwg.mxu0
      %s672 = scalar_lea.vmem %s1, 40
      %v673 = vld [vmem:[%s672] sm:$0xff]
      %v675 = vsel %vm214, %v673, 0
      %v678 = vsel %vm218, %v506, 0
      %v681 = vsel %vm218, %v507, 0
      %683 = vmatprep.subr.mxu0 %v681
      %684 = vmatpush1.msra.mxu0 %v678
      %685 = vmatprep.subr.mxu0 0.0
      %686 = vmatpush1.msra.mxu0 0.0
      %687 = vmatprep.subr.mxu0 0.0
      %688 = vmatpush1.msra.mxu0 0.0
      %689 = vmatprep.subr.mxu0 0.0
      %690 = vmatpush1.msra.mxu0 0.0
      %691 = vmatprep.subr.mxu0 0.0
      %692 = vmatpush1.msra.mxu0 0.0
      %693 = vmatprep.subr.mxu0 0.0
      %694 = vmatpush1.msra.mxu0 0.0
      %695 = vmatprep.subr.mxu0 0.0
      %696 = vmatpush1.msra.mxu0 0.0
      %697 = vmatprep.subr.mxu0 0.0
      %698 = vmatpush1.msra.mxu0 0.0
      %699 = vmatprep.subr.mxu0 0.0
      %700 = vmatpush1.msra.mxu0 0.0
      %701 = vmatprep.subr.mxu0 0.0
      %702 = vmatpush1.msra.mxu0 0.0
      %703 = vmatprep.subr.mxu0 0.0
      %704 = vmatpush1.msra.mxu0 0.0
      %705 = vmatprep.subr.mxu0 0.0
      %706 = vmatpush1.msra.mxu0 0.0
      %707 = vmatprep.subr.mxu0 0.0
      %708 = vmatpush1.msra.mxu0 0.0
      %709 = vmatprep.subr.mxu0 0.0
      %710 = vmatpush1.msra.mxu0 0.0
      %711 = vmatprep.subr.mxu0 0.0
      %712 = vmatpush1.msra.mxu0 0.0
      %713 = vmatprep.subr.mxu0 0.0
      %714 = vmatpush1.msra.mxu0 0.0
      %715 = vmatprep.subr.mxu0 0.0
      %716 = vmatpush1.msra.mxu0 0.0
      %717 = vmatprep.subr.mxu0 0.0
      %718 = vmatpush1.msra.mxu0 0.0
      %719 = vmatprep.subr.mxu0 0.0
      %720 = vmatpush1.msra.mxu0 0.0
      %721 = vmatprep.subr.mxu0 0.0
      %722 = vmatpush1.msra.mxu0 0.0
      %723 = vmatprep.subr.mxu0 0.0
      %724 = vmatpush1.msra.mxu0 0.0
      %725 = vmatprep.subr.mxu0 0.0
      %726 = vmatpush1.msra.mxu0 0.0
      %727 = vmatprep.subr.mxu0 0.0
      %728 = vmatpush1.msra.mxu0 0.0
      %729 = vmatprep.subr.mxu0 0.0
      %730 = vmatpush1.msra.mxu0 0.0
      %731 = vmatprep.subr.mxu0 0.0
      %732 = vmatpush1.msra.mxu0 0.0
      %733 = vmatprep.subr.mxu0 0.0
      %734 = vmatpush1.msra.mxu0 0.0
      %735 = vmatprep.subr.mxu0 0.0
      %736 = vmatpush1.msra.mxu0 0.0
      %737 = vmatprep.subr.mxu0 0.0
      %738 = vmatpush1.msra.mxu0 0.0
      %739 = vmatprep.subr.mxu0 0.0
      %740 = vmatpush1.msra.mxu0 0.0
      %741 = vmatprep.subr.mxu0 0.0
      %742 = vmatpush1.msra.mxu0 0.0
      %743 = vmatprep.subr.mxu0 0.0
      %744 = vmatpush1.msra.mxu0 0.0
      %745 = vmatprep.subr.mxu0 0.0
      %746 = vmatpush1.msra.mxu0 0.0
      %747 = vmatprep.mubr.f32.mxu0 0.0
      %748 = vmatmul.mubr.f32.gmra.mrb[0].mxu0 %v675
      %v749 = vpop.f32.mrb[0].mxu0
      %v750 = vadd.f32 0.0, %v749
      %v751 = vpop.f32.mrb[0].mxu0
      %v752 = vadd.f32 0.0, %v751
      %753 = vdwg.mxu0
      %v754 = vadd.f32 %v668, %v750
      %v755 = vadd.f32 %v670, %v752
      %s756 = scalar_lea.vmem %s2, 8
      %v757 = vld [vmem:[%s756] sm:$0xff]
      %759 = vset.pattern.permute.xlu0 0
      %760 = vperm.xlu0 %759, %v757
      %v761 = vpop.permute.xlu0 %760
      %v763 = vadd.f32 %v754, %v761
      %v764 = vadd.f32 %v755, %v761
      %v765 = vmax.f32 %v763, 0.0
      %v766 = vmax.f32 %v764, 0.0
      %v769 = vrot.slane %v765, 2
      %v770 = vrot.slane %v766, 2
      %773 = vst [vmem:[%s170] sm:$0xc0] %v769
      %774 = vst [vmem:[%s170 + $0x8] sm:$0xc0] %v770
      %775 = vst [vmem:[%s170 + $0x10] sm:$0x3] %v769
      %776 = vst [vmem:[%s170 + $0x18] sm:$0x3] %v770
      %v777 = vld [vmem:[%s165] sm:$0xc0]
      %v778 = vld [vmem:[%s165 + $0x8] sm:$0xc0]
      %v781 = vrot.slane %v777, 6
      %v782 = vrot.slane %v778, 6
      %v785 = vsel %vm186, %v781, %v769
      %v786 = vsel %vm186, %v782, %v770
      %787 = vrot.lane.b32.xlu0 %v785, 16
      %v788 = vpop.permute.xlu0 %787
      %789 = vrot.lane.b32.xlu0 %v786, 16
      %v790 = vpop.permute.xlu0 %789
      %v791 = vsel %vm195, %v788, %v790
      %v792 = vsel %vm195, %v790, %v788
      %v793 = vsel %vm189, %v792, 0.0
      %v794 = vsel %vm190, %v791, 0.0
      %795 = vrot.lane.b32.xlu0 %v785, 112
      %v796 = vpop.permute.xlu0 %795
      %797 = vrot.lane.b32.xlu0 %v786, 112
      %v798 = vpop.permute.xlu0 %797
      %v799 = vsel %vm206, %v796, %v798
      %v800 = vsel %vm206, %v798, %v796
      %v801 = vsel %vm200, %v799, 0.0
      %v802 = vsel %vm201, %v800, 0.0
      %s803 = scalar_lea.vmem %s1, 48
      %v804 = vld [vmem:[%s803] sm:$0xff]
      %s805 = scalar_lea.vmem %s1, 56
      %v806 = vld [vmem:[%s805] sm:$0xff]
      %v808 = vsel %vm214, %v806, 0
      %v811 = vsel %vm218, %v785, 0
      %v814 = vsel %vm218, %v786, 0
      %816 = vmatprep.subr.mxu0 %v814
      %817 = vmatpush1.msra.mxu0 %v811
      %818 = vmatprep.subr.mxu0 0.0
      %819 = vmatpush1.msra.mxu0 0.0
      %820 = vmatprep.subr.mxu0 0.0
      %821 = vmatpush1.msra.mxu0 0.0
      %822 = vmatprep.subr.mxu0 0.0
      %823 = vmatpush1.msra.mxu0 0.0
      %824 = vmatprep.subr.mxu0 0.0
      %825 = vmatpush1.msra.mxu0 0.0
      %826 = vmatprep.subr.mxu0 0.0
      %827 = vmatpush1.msra.mxu0 0.0
      %828 = vmatprep.subr.mxu0 0.0
      %829 = vmatpush1.msra.mxu0 0.0
      %830 = vmatprep.subr.mxu0 0.0
      %831 = vmatpush1.msra.mxu0 0.0
      %832 = vmatprep.subr.mxu0 0.0
      %833 = vmatpush1.msra.mxu0 0.0
      %834 = vmatprep.subr.mxu0 0.0
      %835 = vmatpush1.msra.mxu0 0.0
      %836 = vmatprep.subr.mxu0 0.0
      %837 = vmatpush1.msra.mxu0 0.0
      %838 = vmatprep.subr.mxu0 0.0
      %839 = vmatpush1.msra.mxu0 0.0
      %840 = vmatprep.subr.mxu0 0.0
      %841 = vmatpush1.msra.mxu0 0.0
      %842 = vmatprep.subr.mxu0 0.0
      %843 = vmatpush1.msra.mxu0 0.0
      %844 = vmatprep.subr.mxu0 0.0
      %845 = vmatpush1.msra.mxu0 0.0
      %846 = vmatprep.subr.mxu0 0.0
      %847 = vmatpush1.msra.mxu0 0.0
      %848 = vmatprep.subr.mxu0 0.0
      %849 = vmatpush1.msra.mxu0 0.0
      %850 = vmatprep.subr.mxu0 0.0
      %851 = vmatpush1.msra.mxu0 0.0
      %852 = vmatprep.subr.mxu0 0.0
      %853 = vmatpush1.msra.mxu0 0.0
      %854 = vmatprep.subr.mxu0 0.0
      %855 = vmatpush1.msra.mxu0 0.0
      %856 = vmatprep.subr.mxu0 0.0
      %857 = vmatpush1.msra.mxu0 0.0
      %858 = vmatprep.subr.mxu0 0.0
      %859 = vmatpush1.msra.mxu0 0.0
      %860 = vmatprep.subr.mxu0 0.0
      %861 = vmatpush1.msra.mxu0 0.0
      %862 = vmatprep.subr.mxu0 0.0
      %863 = vmatpush1.msra.mxu0 0.0
      %864 = vmatprep.subr.mxu0 0.0
      %865 = vmatpush1.msra.mxu0 0.0
      %866 = vmatprep.subr.mxu0 0.0
      %867 = vmatpush1.msra.mxu0 0.0
      %868 = vmatprep.subr.mxu0 0.0
      %869 = vmatpush1.msra.mxu0 0.0
      %870 = vmatprep.subr.mxu0 0.0
      %871 = vmatpush1.msra.mxu0 0.0
      %872 = vmatprep.subr.mxu0 0.0
      %873 = vmatpush1.msra.mxu0 0.0
      %874 = vmatprep.subr.mxu0 0.0
      %875 = vmatpush1.msra.mxu0 0.0
      %876 = vmatprep.subr.mxu0 0.0
      %877 = vmatpush1.msra.mxu0 0.0
      %878 = vmatprep.subr.mxu0 0.0
      %879 = vmatpush1.msra.mxu0 0.0
      %880 = vmatprep.mubr.f32.mxu0 0.0
      %881 = vmatmul.mubr.f32.gmra.mrb[0].mxu0 %v808
      %v882 = vpop.f32.mrb[0].mxu0
      %v883 = vadd.f32 0.0, %v882
      %v884 = vpop.f32.mrb[0].mxu0
      %v885 = vadd.f32 0.0, %v884
      %886 = vdwg.mxu0
      %v888 = vsel %vm214, %v804, 0
      %v891 = vsel %vm218, %v793, 0
      %v894 = vsel %vm218, %v794, 0
      %896 = vmatprep.subr.mxu0 %v894
      %897 = vmatpush1.msra.mxu0 %v891
      %898 = vmatprep.subr.mxu0 0.0
      %899 = vmatpush1.msra.mxu0 0.0
      %900 = vmatprep.subr.mxu0 0.0
      %901 = vmatpush1.msra.mxu0 0.0
      %902 = vmatprep.subr.mxu0 0.0
      %903 = vmatpush1.msra.mxu0 0.0
      %904 = vmatprep.subr.mxu0 0.0
      %905 = vmatpush1.msra.mxu0 0.0
      %906 = vmatprep.subr.mxu0 0.0
      %907 = vmatpush1.msra.mxu0 0.0
      %908 = vmatprep.subr.mxu0 0.0
      %909 = vmatpush1.msra.mxu0 0.0
      %910 = vmatprep.subr.mxu0 0.0
      %911 = vmatpush1.msra.mxu0 0.0
      %912 = vmatprep.subr.mxu0 0.0
      %913 = vmatpush1.msra.mxu0 0.0
      %914 = vmatprep.subr.mxu0 0.0
      %915 = vmatpush1.msra.mxu0 0.0
      %916 = vmatprep.subr.mxu0 0.0
      %917 = vmatpush1.msra.mxu0 0.0
      %918 = vmatprep.subr.mxu0 0.0
      %919 = vmatpush1.msra.mxu0 0.0
      %920 = vmatprep.subr.mxu0 0.0
      %921 = vmatpush1.msra.mxu0 0.0
      %922 = vmatprep.subr.mxu0 0.0
      %923 = vmatpush1.msra.mxu0 0.0
      %924 = vmatprep.subr.mxu0 0.0
      %925 = vmatpush1.msra.mxu0 0.0
      %926 = vmatprep.subr.mxu0 0.0
      %927 = vmatpush1.msra.mxu0 0.0
      %928 = vmatprep.subr.mxu0 0.0
      %929 = vmatpush1.msra.mxu0 0.0
      %930 = vmatprep.subr.mxu0 0.0
      %931 = vmatpush1.msra.mxu0 0.0
      %932 = vmatprep.subr.mxu0 0.0
      %933 = vmatpush1.msra.mxu0 0.0
      %934 = vmatprep.subr.mxu0 0.0
      %935 = vmatpush1.msra.mxu0 0.0
      %936 = vmatprep.subr.mxu0 0.0
      %937 = vmatpush1.msra.mxu0 0.0
      %938 = vmatprep.subr.mxu0 0.0
      %939 = vmatpush1.msra.mxu0 0.0
      %940 = vmatprep.subr.mxu0 0.0
      %941 = vmatpush1.msra.mxu0 0.0
      %942 = vmatprep.subr.mxu0 0.0
      %943 = vmatpush1.msra.mxu0 0.0
      %944 = vmatprep.subr.mxu0 0.0
      %945 = vmatpush1.msra.mxu0 0.0
      %946 = vmatprep.subr.mxu0 0.0
      %947 = vmatpush1.msra.mxu0 0.0
      %948 = vmatprep.subr.mxu0 0.0
      %949 = vmatpush1.msra.mxu0 0.0
      %950 = vmatprep.subr.mxu0 0.0
      %951 = vmatpush1.msra.mxu0 0.0
      %952 = vmatprep.subr.mxu0 0.0
      %953 = vmatpush1.msra.mxu0 0.0
      %954 = vmatprep.subr.mxu0 0.0
      %955 = vmatpush1.msra.mxu0 0.0
      %956 = vmatprep.subr.mxu0 0.0
      %957 = vmatpush1.msra.mxu0 0.0
      %958 = vmatprep.subr.mxu0 0.0
      %959 = vmatpush1.msra.mxu0 0.0
      %960 = vmatprep.mubr.f32.mxu0 0.0
      %961 = vmatmul.mubr.f32.gmra.mrb[0].mxu0 %v888
      %v962 = vpop.f32.mrb[0].mxu0
      %v963 = vadd.f32 %v883, %v962
      %v964 = vpop.f32.mrb[0].mxu0
      %v965 = vadd.f32 %v885, %v964
      %966 = vdwg.mxu0
      %s967 = scalar_lea.vmem %s1, 64
      %v968 = vld [vmem:[%s967] sm:$0xff]
      %v970 = vsel %vm214, %v968, 0
      %v973 = vsel %vm218, %v801, 0
      %v976 = vsel %vm218, %v802, 0
      %978 = vmatprep.subr.mxu0 %v976
      %979 = vmatpush1.msra.mxu0 %v973
      %980 = vmatprep.subr.mxu0 0.0
      %981 = vmatpush1.msra.mxu0 0.0
      %982 = vmatprep.subr.mxu0 0.0
      %983 = vmatpush1.msra.mxu0 0.0
      %984 = vmatprep.subr.mxu0 0.0
      %985 = vmatpush1.msra.mxu0 0.0
      %986 = vmatprep.subr.mxu0 0.0
      %987 = vmatpush1.msra.mxu0 0.0
      %988 = vmatprep.subr.mxu0 0.0
      %989 = vmatpush1.msra.mxu0 0.0
      %990 = vmatprep.subr.mxu0 0.0
      %991 = vmatpush1.msra.mxu0 0.0
      %992 = vmatprep.subr.mxu0 0.0
      %993 = vmatpush1.msra.mxu0 0.0
      %994 = vmatprep.subr.mxu0 0.0
      %995 = vmatpush1.msra.mxu0 0.0
      %996 = vmatprep.subr.mxu0 0.0
      %997 = vmatpush1.msra.mxu0 0.0
      %998 = vmatprep.subr.mxu0 0.0
      %999 = vmatpush1.msra.mxu0 0.0
      %1000 = vmatprep.subr.mxu0 0.0
      %1001 = vmatpush1.msra.mxu0 0.0
      %1002 = vmatprep.subr.mxu0 0.0
      %1003 = vmatpush1.msra.mxu0 0.0
      %1004 = vmatprep.subr.mxu0 0.0
      %1005 = vmatpush1.msra.mxu0 0.0
      %1006 = vmatprep.subr.mxu0 0.0
      %1007 = vmatpush1.msra.mxu0 0.0
      %1008 = vmatprep.subr.mxu0 0.0
      %1009 = vmatpush1.msra.mxu0 0.0
      %1010 = vmatprep.subr.mxu0 0.0
      %1011 = vmatpush1.msra.mxu0 0.0
      %1012 = vmatprep.subr.mxu0 0.0
      %1013 = vmatpush1.msra.mxu0 0.0
      %1014 = vmatprep.subr.mxu0 0.0
      %1015 = vmatpush1.msra.mxu0 0.0
      %1016 = vmatprep.subr.mxu0 0.0
      %1017 = vmatpush1.msra.mxu0 0.0
      %1018 = vmatprep.subr.mxu0 0.0
      %1019 = vmatpush1.msra.mxu0 0.0
      %1020 = vmatprep.subr.mxu0 0.0
      %1021 = vmatpush1.msra.mxu0 0.0
      %1022 = vmatprep.subr.mxu0 0.0
      %1023 = vmatpush1.msra.mxu0 0.0
      %1024 = vmatprep.subr.mxu0 0.0
      %1025 = vmatpush1.msra.mxu0 0.0
      %1026 = vmatprep.subr.mxu0 0.0
      %1027 = vmatpush1.msra.mxu0 0.0
      %1028 = vmatprep.subr.mxu0 0.0
      %1029 = vmatpush1.msra.mxu0 0.0
      %1030 = vmatprep.subr.mxu0 0.0
      %1031 = vmatpush1.msra.mxu0 0.0
      %1032 = vmatprep.subr.mxu0 0.0
      %1033 = vmatpush1.msra.mxu0 0.0
      %1034 = vmatprep.subr.mxu0 0.0
      %1035 = vmatpush1.msra.mxu0 0.0
      %1036 = vmatprep.subr.mxu0 0.0
      %1037 = vmatpush1.msra.mxu0 0.0
      %1038 = vmatprep.subr.mxu0 0.0
      %1039 = vmatpush1.msra.mxu0 0.0
      %1040 = vmatprep.subr.mxu0 0.0
      %1041 = vmatpush1.msra.mxu0 0.0
      %1042 = vmatprep.mubr.f32.mxu0 0.0
      %1043 = vmatmul.mubr.f32.gmra.mrb[0].mxu0 %v970
      %v1044 = vpop.f32.mrb[0].mxu0
      %v1045 = vadd.f32 0.0, %v1044
      %v1046 = vpop.f32.mrb[0].mxu0
      %v1047 = vadd.f32 0.0, %v1046
      %1048 = vdwg.mxu0
      %v1049 = vadd.f32 %v963, %v1045
      %v1050 = vadd.f32 %v965, %v1047
      %s1051 = scalar_lea.vmem %s2, 16
      %v1052 = vld [vmem:[%s1051] sm:$0xff]
      %1054 = vset.pattern.permute.xlu0 0
      %1055 = vperm.xlu0 %1054, %v1052
      %v1056 = vpop.permute.xlu0 %1055
      %v1058 = vadd.f32 %v1049, %v1056
      %v1059 = vadd.f32 %v1050, %v1056
      %v1060 = vmax.f32 %v1058, 0.0
      %v1061 = vmax.f32 %v1059, 0.0
      %v1064 = vrot.slane %v1060, 6
      %v1065 = vrot.slane %v1061, 6
      %1068 = vst [vmem:[%s170 + $0x10] sm:$0xfc] %v1064
      %1069 = vst [vmem:[%s170 + $0x18] sm:$0xfc] %v1065
      %1070 = vst [vmem:[%s170 + $0x20] sm:$0x3] %v1064
      %1071 = vst [vmem:[%s170 + $0x28] sm:$0x3] %v1065
      %p1072 = scmp.lt.s32.totalorder %s14, 1
      %s1073 = scalar_select %p1072, %s14, 1
      %s1074 = smul.addr %s1073, 6
      %s1075 = smul.addr %s1074, 8
      %s1076 = scalar_lea.vmem %s3, %s1075
      // Predicated region
      $region33: #{hs_block_forward.1} parent=31 // pred_check
        %p1077 = pneg %p100
      $region34: #{hs_block_forward.1} parent=31 // pred_check_branch
        %1079 = sbr.rel (%p1077) target = $region36
      $region35: #{hs_block_forward.1} parent=31 // pred_region
        _
      $region36: #{hs_block_forward.1} parent=31 // pred_fallthru
        _
    $region32: #{hs_block_forward.1} parent=5 // pred_fallthru
      _
    %p1080 = scmp.le.s32.totalorder 2, %s9
    // Predicated region
    $region37: #{hs_block_forward.1} parent=5 // pred_check
      %p1081 = pneg %p1080
    $region38: #{hs_block_forward.1} parent=5 // pred_check_branch
      %1083 = sbr.rel (%p1081) target = $region40
    $region39: #{hs_block_forward.1} parent=5 // pred_region
      %s1084 = ssub.s32 %s9, 2
      // Predicated region
      $region41: #{hs_block_forward.1} parent=39 // pred_check
        %p1085 = pneg %p106
      $region42: #{hs_block_forward.1} parent=39 // pred_check_branch
        %1087 = sbr.rel (%p1085) target = $region44
      $region43: #{hs_block_forward.1} parent=39 // pred_region
        %p1088 = scmp.lt.s32.totalorder %s15, 1
        %s1089 = scalar_select %p1088, %s15, 1
        %s1090 = smul.addr %s1089, 6
        %s1091 = smul.addr %s1090, 8
        %s1092 = scalar_lea.vmem %s3, %s1091
      $region44: #{hs_block_forward.1} parent=39 // pred_fallthru
        _
    $region40: #{hs_block_forward.1} parent=5 // pred_fallthru
      _
  $region6: #{hs_block_forward.1} parent=0 // loop_footer
    %s13 = sadd.s32 1, %s9
  $region7: #{hs_block_forward.1} parent=0 // loop_footer_branch
    %8 = sbr.rel target = $region3
  $region8: #{hs_block_forward.1} parent=0 // loop_exit
    _

</llo_original>
